<compile_context>
chip_gen: v7x
topology: tpu7x:2x2x1
jax: 0.10.0
libtpu: 0.0.40
codegen_flags: <defaults>
</compile_context>

<pallas_src>
import jax
import jax.numpy as jnp
from jax.experimental import pallas as pl
from jax.experimental.pallas import tpu as pltpu


def _mtler_kernel(loss_ref, log_var_ref, re_loss_ref):
    # Shape-(1,) SMEM inputs: read the two scalars with static index 0.
    lv_s = log_var_ref[0]
    ls_s = loss_ref[0]
    # Broadcast to a (1,1) tile so exp/mul/add run on the vector units (EUP/VPU).
    lv = jnp.full((1, 1), lv_s, dtype=jnp.float32)
    ls = jnp.full((1, 1), ls_s, dtype=jnp.float32)
    re_loss_ref[...] = jnp.exp(-lv) * ls + lv


def mtler_forward(losses, log_vars):
    """losses: (task_num,) f32, log_vars: (task_num,) f32 -> (re_loss scalar, log_vars)."""
    # Slice in the wrapper: only the LAST task contributes (never-flipped flag),
    # and fixed shape-(1,) inputs avoid per-task_num recompiles of the kernel.
    last_loss = losses[-1:].astype(jnp.float32)      # shape (1,)
    last_log_var = log_vars[-1:].astype(jnp.float32)  # shape (1,)

    re_loss_2d = pl.pallas_call(
        _mtler_kernel,
        out_shape=jax.ShapeDtypeStruct((1, 1), jnp.float32),
        in_specs=[
            pl.BlockSpec(memory_space=pltpu.MemorySpace.SMEM),
            pl.BlockSpec(memory_space=pltpu.MemorySpace.SMEM),
        ],
        out_specs=pl.BlockSpec((1, 1), lambda: (0, 0)),
        # 2 scalars in + 1 scalar out = 12 bytes; 1 exp, 1 mul + 1 add.
        cost_estimate=pl.CostEstimate(flops=2, transcendentals=1, bytes_accessed=12),
    )(last_loss, last_log_var)

    # The module also returns its (unchanged) log_vars parameter: return the
    # input array directly instead of DMA-ing it through the kernel.
    return re_loss_2d[0, 0], log_vars


def mtler_ref(losses, log_vars):
    # Pure-JAX reference reproducing the PyTorch loop (with the never-flipped flag).
    re_loss = None
    for i in range(losses.shape[0]):
        precision = jnp.exp(-log_vars[i])
        re_loss = precision * losses[i] + log_vars[i]   # overwritten each iter
    return re_loss, log_vars


if __name__ == "__main__":
    task_num = 2
    key = jax.random.PRNGKey(0)
    k_loss, k_lv = jax.random.split(key)

    # Deterministic example per-task scalar losses.
    losses = jax.random.uniform(k_loss, (task_num,), dtype=jnp.float32) * 2.0 + 0.1

    # Case 1: parameter init matching the module (torch.zeros(task_num)).
    log_vars0 = jnp.zeros((task_num,), dtype=jnp.float32)
    re_loss, log_vars_out = mtler_forward(losses, log_vars0)
    jax.block_until_ready(re_loss)
    jax.block_until_ready(log_vars_out)
    re_ref, lv_ref = mtler_ref(losses, log_vars0)
    assert jnp.allclose(re_loss, re_ref, atol=1e-6, rtol=1e-6), (re_loss, re_ref)
    assert jnp.allclose(log_vars_out, lv_ref), (log_vars_out, lv_ref)

    # Case 2: non-zero log_vars to exercise the exp path.
    log_vars1 = jax.random.normal(k_lv, (task_num,), dtype=jnp.float32) * 0.5
    re_loss1, log_vars_out1 = mtler_forward(losses, log_vars1)
    jax.block_until_ready(re_loss1)
    re_ref1, lv_ref1 = mtler_ref(losses, log_vars1)
    assert jnp.allclose(re_loss1, re_ref1, atol=1e-6, rtol=1e-6), (re_loss1, re_ref1)
    assert jnp.allclose(log_vars_out1, lv_ref1), (log_vars_out1, lv_ref1)

    # Case 3: different task_num reuses the SAME kernel shape (no recompile hazard).
    losses3 = jnp.arange(1.0, 4.0, dtype=jnp.float32)          # task_num = 3
    log_vars3 = jnp.array([0.1, -0.2, 0.3], dtype=jnp.float32)
    re_loss3, _ = mtler_forward(losses3, log_vars3)
    jax.block_until_ready(re_loss3)
    re_ref3, _ = mtler_ref(losses3, log_vars3)
    assert jnp.allclose(re_loss3, re_ref3, atol=1e-6, rtol=1e-6), (re_loss3, re_ref3)

    print("KERNEL_OK")
</pallas_src>

<mosaic_0001>
module attributes {stable_mosaic.version = 11 : i64} {
  func.func @_mtler_kernel(%arg0: memref<1xf32, #tpu.memory_space<smem>>, %arg1: memref<1xf32, #tpu.memory_space<smem>>, %arg2: memref<1x1xf32, #tpu.memory_space<vmem>>) attributes {dimension_semantics = [], scalar_prefetch = 0 : i64, scratch_operands = 0 : i64, tpu.core_type = #tpu.core_type<tc>} {
    %c0 = arith.constant 0 : index
    %0 = memref.load %arg1[%c0] : memref<1xf32, #tpu.memory_space<smem>>
    %c0_0 = arith.constant 0 : index
    %1 = memref.load %arg0[%c0_0] : memref<1xf32, #tpu.memory_space<smem>>
    %2 = vector.broadcast %0 : f32 to vector<1x1xf32>
    %3 = vector.broadcast %1 : f32 to vector<1x1xf32>
    %cst = arith.constant 0.000000e+00 : f32
    %4 = vector.broadcast %cst : f32 to vector<1x1xf32>
    %5 = arith.subf %4, %2 : vector<1x1xf32>
    %6 = math.exp %5 : vector<1x1xf32>
    %7 = arith.mulf %6, %3 : vector<1x1xf32>
    %8 = arith.addf %7, %2 : vector<1x1xf32>
    %c0_1 = arith.constant 0 : index
    %c0_2 = arith.constant 0 : index
    %9 = vector.load %arg2[%c0_1, %c0_2] : memref<1x1xf32, #tpu.memory_space<vmem>>, vector<1x1xf32>
    tpu.vector_store %arg2[%c0_1, %c0_2], %8 {strides = array<i32>} : memref<1x1xf32, #tpu.memory_space<vmem>>, vector<1x1xf32>,
    return
  }
}

</mosaic_0001>

<llo_original>
// kernel: tpu_custom_call.1
$region0: #{tpu_custom_call.1}
  #allocation0 [shape = 'u32[]', space=smem, size = 0x4, offset = 0x4, fixed_abs, tag = 'smem constant byte address 0x4 - core index']
  #allocation1 [shape = 'u32[144,128]{1,0:T(1,128)}', space=vmem, size = 0x12000, scoped, tag = 'internal scratch']
  #allocation2 [shape = 'f32[1]{0:T(128)S(6)}', space=smem, size = 0x200, scoped, tag = 'scoped memory for tpu_custom_call.1']
  #allocation3 [shape = 'f32[1]{0:T(128)S(6)}', space=smem, size = 0x200, scoped, tag = 'scoped memory for tpu_custom_call.1']
  %s0 = inlined_call_operand.<no memory space> [shape: f32[1], index: 0, kind: input, shape index: {}]
  %s1 = inlined_call_operand.<no memory space> [shape: f32[1], index: 1, kind: input, shape index: {}]
  %s2 = inlined_call_operand.hbm [shape: f32[1,1], index: 2, kind: output, shape index: {}]
  %s3 = sld [smem:[#allocation0]]
  $region18: #{tpu_custom_call.1} parent=0
    _
  %s5 = ssub.s32 1, %s3
  %s6 = scalar_select 0, %s5, %s3
  %7 = sst [smem:[#allocation2]] %s0
  %8 = sst [smem:[#allocation3]] %s1
  $region1: #{tpu_custom_call.1} parent=0
    #allocation4 [shape = 'u8[512]{0}', space=vmem, size = 0x400, scoped, tag = 'output window, operand 0, single buffered']
    #allocation5 [shape = 's32[1]{0}', space=sflag, size = 0x4, scoped, tag = 'scoped memory for tpu_custom_call.1']
    %9 = vsyncpa [#allocation5], 0
    // Predicated region
    $region2: #{tpu_custom_call.1} parent=1 // pred_check
      _
    $region3: #{tpu_custom_call.1} parent=1 // pred_check_branch
      %11 = sbr.rel (0) target = $region5
    $region4: #{tpu_custom_call.1} parent=1 // pred_region
      _
    $region5: #{tpu_custom_call.1} parent=1 // pred_fallthru
      _
    // Predicated region
    $region6: #{tpu_custom_call.1} parent=1 // pred_check
      _
    $region7: #{tpu_custom_call.1} parent=1 // pred_check_branch
      %13 = sbr.rel (0) target = $region9
    $region8: #{tpu_custom_call.1} parent=1 // pred_region
      _
    $region9: #{tpu_custom_call.1} parent=1 // pred_fallthru
      _
    %s14 = sld [smem:[#allocation3]]
    %s15 = sld [smem:[#allocation2]]
    %v16 = vstv %s14
    %v17 = vstv %s15
    %v18 = vsub.f32 0.0, %v16
    %v19 = vmul.f32 %v18, 1.442695
    %v20 = vpow.pop %v19
    %v21 = vmul.f32 %v20, %v17
    %v22 = vadd.f32 %v21, %v16
    %vm23 = vcmask 0
    %24 = vst.msk [vmem:[#allocation4] sm:$0x1] %vm23, %v22
    // Predicated region
    $region10: #{tpu_custom_call.1} parent=1 // pred_check
      _
    $region11: #{tpu_custom_call.1} parent=1 // pred_check_branch
      %26 = sbr.rel (0) target = $region13
    $region12: #{tpu_custom_call.1} parent=1 // pred_region
      %s28 = ssub.s32 16, 16
      %29 = vsyncadd [#allocation5], %s28
      %s31 = sshll.u32 [#allocation4], 4
      %s32 = int_to_ptr.vmem [resolvable:$true] %s31
      %34 = dma.vmem_to_hbm [thread:$0]  %s32, 16, %s2, [#allocation5]
    $region13: #{tpu_custom_call.1} parent=1 // pred_fallthru
      _
    // Predicated region
    $region14: #{tpu_custom_call.1} parent=1 // pred_check
      _
    $region15: #{tpu_custom_call.1} parent=1 // pred_check_branch
      %36 = sbr.rel (0) target = $region17
    $region16: #{tpu_custom_call.1} parent=1 // pred_region
      %37 = dma.done [#allocation5], 16
    $region17: #{tpu_custom_call.1} parent=1 // pred_fallthru
      _
    %38 = vsyncpa [#allocation5], 1

</llo_original>
